<compile_context>
chip_gen: v6e
topology: v6e:2x2x1
jax: 0.10.0
libtpu: 0.0.40
codegen_flags: <defaults>
</compile_context>

<pallas_src>
import jax
import jax.numpy as jnp
from jax.experimental import pallas as pl
from jax.experimental.pallas import tpu as pltpu

# --- deterministic "parameters" (buffers of the module) ------------------
W1 = 0.1            # weight of the L1 regularizer
W2 = 0.7            # weight of the L2 regularizer
TOTAL_WEIGHT = 1.0  # outer weight (only used by .term / .pop, not by forward)
NORMALIZATION_FACTOR = 1.0 / (W1 + W2)   # reciprocal of sum of base weights

# Split the row sweep into this many independent "parallel" grid slices.
# On v7x (2 TensorCores) megacore shards them; on v5e/v6e it is just a
# harmless extra (serial) grid dimension.
NUM_CORE_SPLITS = 2

# Target ~2 MiB per input block: big enough to amortize per-step overhead and
# approach the HBM roofline, small enough for every generation's VMEM budget.
_TARGET_BLOCK_BYTES = 2 * 1024 * 1024


def _ceil_div(a: int, b: int) -> int:
    return -(-a // b)


def _round_up(value: int, multiple: int) -> int:
    return _ceil_div(value, multiple) * multiple


def _combined_reg_kernel(x_ref, abs_ref, l2_ref):
    """Accumulate sum(|x|) and sum(per-row L2 norms) for this split's rows."""
    i = pl.program_id(1)

    @pl.when(i == 0)
    def _init():
        abs_ref[...] = jnp.zeros_like(abs_ref)
        l2_ref[...] = jnp.zeros_like(l2_ref)

    x = x_ref[...].astype(jnp.float32)                   # (TILE_N, D)
    # L1 path fused: mean of per-row L1 norms == sum(|x|) / N.
    abs_ref[...] += jnp.sum(jnp.abs(x))
    # L2 path: per-row reduce + sqrt must stay inside the tile.
    row_sq = jnp.sum(x * x, axis=-1, keepdims=True)      # (TILE_N, 1)
    l2_ref[...] += jnp.sum(jnp.sqrt(row_sq))


def combined_regularizer_forward(x: jax.Array, *, tile_rows: int | None = None) -> jax.Array:
    """Pallas implementation of CombinedRegularizer.forward. x: [N, D] -> scalar f32."""
    n, d = x.shape
    itemsize = jnp.dtype(x.dtype).itemsize

    rows_per_split = _ceil_div(n, NUM_CORE_SPLITS)
    if tile_rows is None:
        tile_rows = max(8, (_TARGET_BLOCK_BYTES // max(1, d * itemsize)) // 8 * 8)
    tile_rows = max(8, _round_up(tile_rows, 8))
    tile_rows = min(tile_rows, _round_up(rows_per_split, 8))

    tiles_per_split = _ceil_div(rows_per_split, tile_rows)
    padded_rows = NUM_CORE_SPLITS * tiles_per_split * tile_rows
    if padded_rows != n:
        # Zero rows contribute nothing to either partial sum; the mean below
        # divides by the true N.
        x = jnp.pad(x, ((0, padded_rows - n), (0, 0)))

    abs_part, l2_part = pl.pallas_call(
        _combined_reg_kernel,
        out_shape=(
            jax.ShapeDtypeStruct((NUM_CORE_SPLITS, 1, 1), jnp.float32),
            jax.ShapeDtypeStruct((NUM_CORE_SPLITS, 1, 1), jnp.float32),
        ),
        grid_spec=pltpu.PrefetchScalarGridSpec(
            num_scalar_prefetch=0,
            grid=(NUM_CORE_SPLITS, tiles_per_split),
            in_specs=[
                pl.BlockSpec(
                    (tile_rows, d),
                    lambda c, i: (c * tiles_per_split + i, 0),
                ),
            ],
            out_specs=[
                pl.BlockSpec((1, 1, 1), lambda c, i: (c, 0, 0)),
                pl.BlockSpec((1, 1, 1), lambda c, i: (c, 0, 0)),
            ],
        ),
        compiler_params=pltpu.CompilerParams(
            dimension_semantics=("parallel", "arbitrary"),
        ),
        cost_estimate=pl.CostEstimate(
            flops=3 * n * d,
            transcendentals=n,
            bytes_accessed=n * d * itemsize + 8 * NUM_CORE_SPLITS,
        ),
    )(x)

    mean_l1 = jnp.sum(abs_part) / jnp.float32(n)
    mean_l2 = jnp.sum(l2_part) / jnp.float32(n)
    return jnp.float32(NORMALIZATION_FACTOR) * (
        jnp.float32(W1) * mean_l1 + jnp.float32(W2) * mean_l2
    )


def combined_regularizer_ref(x: jax.Array) -> jax.Array:
    """Pure-JAX reference of CombinedRegularizer.forward."""
    xf = x.astype(jnp.float32)
    l1 = jnp.mean(jnp.sum(jnp.abs(xf), axis=-1))
    l2 = jnp.mean(jnp.sqrt(jnp.sum(xf * xf, axis=-1)))
    return jnp.float32(NORMALIZATION_FACTOR) * (
        jnp.float32(W1) * l1 + jnp.float32(W2) * l2
    )


if __name__ == "__main__":
    key = jax.random.PRNGKey(0)

    # small embedding batch: 8 embedding vectors of dimension 64
    x_small = jax.random.normal(key, (8, 64), dtype=jnp.float32)
    out_small = jax.block_until_ready(combined_regularizer_forward(x_small))
    ref_small = combined_regularizer_ref(x_small)
    assert jnp.allclose(out_small, ref_small, rtol=1e-5, atol=1e-5), (out_small, ref_small)

    # non-multiple row count with a small forced tile: exercises zero-row
    # padding and the multi-tile accumulation path across both grid splits.
    x_big = jax.random.normal(jax.random.PRNGKey(0), (200, 64), dtype=jnp.float32) * 0.5
    out_big = jax.block_until_ready(combined_regularizer_forward(x_big, tile_rows=32))
    ref_big = combined_regularizer_ref(x_big)
    assert jnp.allclose(out_big, ref_big, rtol=1e-5, atol=1e-5), (out_big, ref_big)

    print("KERNEL_OK")
</pallas_src>

<mosaic_0001>
module attributes {stable_mosaic.version = 11 : i64} {
  func.func @_combined_reg_kernel(%arg0: i32, %arg1: i32, %arg2: memref<8x64xf32, #tpu.memory_space<vmem>>, %arg3: memref<1x1x1xf32, #tpu.memory_space<vmem>>, %arg4: memref<1x1x1xf32, #tpu.memory_space<vmem>>) attributes {dimension_semantics = [#tpu.dimension_semantics<parallel>, #tpu.dimension_semantics<arbitrary>], iteration_bounds = array<i64: 2, 1>, scalar_prefetch = 0 : i64, scratch_operands = 0 : i64, tpu.core_type = #tpu.core_type<tc>, window_params = [{transform_indices = @transform_0, window_bounds = array<i64: 8, 64>}, {transform_indices = @transform_1, window_bounds = array<i64: 1, 1, 1>}, {transform_indices = @transform_2, window_bounds = array<i64: 1, 1, 1>}]} {
    %c0_i32 = arith.constant 0 : i32
    %0 = arith.cmpi eq, %arg1, %c0_i32 : i32
    %1 = arith.extui %0 : i1 to i32
    %c0_i32_0 = arith.constant 0 : i32
    %2 = arith.cmpi ne, %1, %c0_i32_0 : i32
    scf.if %2 {
      %cst_16 = arith.constant 0.000000e+00 : f32
      %25 = vector.broadcast %cst_16 : f32 to vector<1x1x1xf32>
      %c0_17 = arith.constant 0 : index
      %c0_18 = arith.constant 0 : index
      %c0_19 = arith.constant 0 : index
      %26 = vector.load %arg3[%c0_17, %c0_18, %c0_19] : memref<1x1x1xf32, #tpu.memory_space<vmem>>, vector<1x1x1xf32>
      tpu.vector_store %arg3[%c0_17, %c0_18, %c0_19], %25 {strides = array<i32>} : memref<1x1x1xf32, #tpu.memory_space<vmem>>, vector<1x1x1xf32>,
      %cst_20 = arith.constant 0.000000e+00 : f32
      %27 = vector.broadcast %cst_20 : f32 to vector<1x1x1xf32>
      %c0_21 = arith.constant 0 : index
      %c0_22 = arith.constant 0 : index
      %c0_23 = arith.constant 0 : index
      %28 = vector.load %arg4[%c0_21, %c0_22, %c0_23] : memref<1x1x1xf32, #tpu.memory_space<vmem>>, vector<1x1x1xf32>
      tpu.vector_store %arg4[%c0_21, %c0_22, %c0_23], %27 {strides = array<i32>} : memref<1x1x1xf32, #tpu.memory_space<vmem>>, vector<1x1x1xf32>,
    } else {
    }
    %c0 = arith.constant 0 : index
    %c0_1 = arith.constant 0 : index
    %3 = vector.load %arg2[%c0, %c0_1] : memref<8x64xf32, #tpu.memory_space<vmem>>, vector<8x64xf32>
    %c0_2 = arith.constant 0 : index
    %c0_3 = arith.constant 0 : index
    %c0_4 = arith.constant 0 : index
    %4 = vector.load %arg3[%c0_2, %c0_3, %c0_4] : memref<1x1x1xf32, #tpu.memory_space<vmem>>, vector<1x1x1xf32>
    %5 = math.absf %3 : vector<8x64xf32>
    %6 = vector.shape_cast %5 : vector<8x64xf32> to vector<1x8x64xf32>
    %cst = arith.constant dense<0.000000e+00> : vector<1xf32>
    %7 = vector.multi_reduction <add>, %6, %cst [1, 2] : vector<1x8x64xf32> to vector<1xf32>
    %8 = vector.shape_cast %7 : vector<1xf32> to vector<1x1x1xf32>
    %9 = vector.extract %8[0, 0, 0] : f32 from vector<1x1x1xf32>
    %10 = vector.broadcast %9 : f32 to vector<1x1x1xf32>
    %11 = arith.addf %4, %10 : vector<1x1x1xf32>
    %c0_5 = arith.constant 0 : index
    %c0_6 = arith.constant 0 : index
    %c0_7 = arith.constant 0 : index
    %12 = vector.load %arg3[%c0_5, %c0_6, %c0_7] : memref<1x1x1xf32, #tpu.memory_space<vmem>>, vector<1x1x1xf32>
    tpu.vector_store %arg3[%c0_5, %c0_6, %c0_7], %11 {strides = array<i32>} : memref<1x1x1xf32, #tpu.memory_space<vmem>>, vector<1x1x1xf32>,
    %13 = arith.mulf %3, %3 : vector<8x64xf32>
    %cst_8 = arith.constant dense<0.000000e+00> : vector<8xf32>
    %14 = vector.multi_reduction <add>, %13, %cst_8 [1] : vector<8x64xf32> to vector<8xf32>
    %15 = vector.shape_cast %14 : vector<8xf32> to vector<8x1xf32>
    %c0_9 = arith.constant 0 : index
    %c0_10 = arith.constant 0 : index
    %c0_11 = arith.constant 0 : index
    %16 = vector.load %arg4[%c0_9, %c0_10, %c0_11] : memref<1x1x1xf32, #tpu.memory_space<vmem>>, vector<1x1x1xf32>
    %17 = math.sqrt %15 : vector<8x1xf32>
    %18 = vector.shape_cast %17 : vector<8x1xf32> to vector<1x8x1xf32>
    %cst_12 = arith.constant dense<0.000000e+00> : vector<1xf32>
    %19 = vector.multi_reduction <add>, %18, %cst_12 [1, 2] : vector<1x8x1xf32> to vector<1xf32>
    %20 = vector.shape_cast %19 : vector<1xf32> to vector<1x1x1xf32>
    %21 = vector.extract %20[0, 0, 0] : f32 from vector<1x1x1xf32>
    %22 = vector.broadcast %21 : f32 to vector<1x1x1xf32>
    %23 = arith.addf %16, %22 : vector<1x1x1xf32>
    %c0_13 = arith.constant 0 : index
    %c0_14 = arith.constant 0 : index
    %c0_15 = arith.constant 0 : index
    %24 = vector.load %arg4[%c0_13, %c0_14, %c0_15] : memref<1x1x1xf32, #tpu.memory_space<vmem>>, vector<1x1x1xf32>
    tpu.vector_store %arg4[%c0_13, %c0_14, %c0_15], %23 {strides = array<i32>} : memref<1x1x1xf32, #tpu.memory_space<vmem>>, vector<1x1x1xf32>,
    return
  }
  func.func @transform_0(%arg0: i32, %arg1: i32) -> (i32, i32) {
    %c1_i32 = arith.constant 1 : i32
    %0 = arith.muli %arg0, %c1_i32 : i32
    %1 = arith.addi %0, %arg1 : i32
    %c0_i32 = arith.constant 0 : i32
    %c0_i32_0 = arith.constant 0 : i32
    return %1, %c0_i32 : i32, i32
  }
  func.func @transform_1(%arg0: i32, %arg1: i32) -> (i32, i32, i32) {
    %c0_i32 = arith.constant 0 : i32
    %c0_i32_0 = arith.constant 0 : i32
    %c0_i32_1 = arith.constant 0 : i32
    return %arg0, %c0_i32, %c0_i32_0 : i32, i32, i32
  }
  func.func @transform_2(%arg0: i32, %arg1: i32) -> (i32, i32, i32) {
    %c0_i32 = arith.constant 0 : i32
    %c0_i32_0 = arith.constant 0 : i32
    %c0_i32_1 = arith.constant 0 : i32
    return %arg0, %c0_i32, %c0_i32_0 : i32, i32, i32
  }
}

</mosaic_0001>

<llo_original>
// kernel: tpu_custom_call.1
$region0: #{tpu_custom_call.1}
  #allocation0 [shape = 'u32[]', space=smem, size = 0x4, offset = 0x4, fixed_abs, tag = 'smem constant byte address 0x4 - core index']
  #allocation1 [shape = 'u32[144,128]{1,0:T(1,128)}', space=vmem, size = 0x12000, scoped, tag = 'internal scratch']
  %s0 = inlined_call_operand.hbm [shape: f32[16,64], index: 0, kind: input, shape index: {}]
  %s1 = inlined_call_operand.vmem [shape: f32[2,1,1], index: 1, kind: output, shape index: {0}]
  %s2 = inlined_call_operand.vmem [shape: f32[2,1,1], index: 2, kind: output, shape index: {1}]
  %3 = xla_tuple %s1, %s2
  %s4 = sld [smem:[#allocation0]]
  $region53: #{tpu_custom_call.1} parent=0
    _
  %s6 = ssub.s32 1, %s4
  %s7 = scalar_select 0, %s6, %s4
  $region1: #{tpu_custom_call.1} parent=0
    #allocation2 [shape = 'u8[8192]{0}', space=vmem, size = 0x2000, scoped, tag = 'input window, operand 0']
    #allocation3 [shape = 's32[2]{0}', space=sflag, size = 0x8, scoped, tag = 'scoped memory for tpu_custom_call.1']
    %8 = vsyncpa [#allocation3], 0
    %s9 = scalar_lea.sflag [#allocation3], 1
    %10 = vsyncpa %s9, 0
    loop: start=0, step=1, limit=4
    $region2: #{tpu_custom_call.1} parent=1 // loop_pre_header
      _
    $region3: #{tpu_custom_call.1} parent=1 // loop_header
      %s12 = sphi 0, %s16
      %p13 = scmp.ge.s32.totalorder %s12, 4
      %s19 = sphi 0, %s31
      %s20 = sphi 0, %s27
      %s21 = sphi 0, %s19
      %s22 = sphi 0, %s20
      %s23 = sphi 0, %s21
      %s24 = sphi 0, %s22
      %s36 = sphi 0, %s38
      %s39 = sphi 0, %s36
      %s40 = sphi 0, %s39
      %s56 = sphi 0, %s40
      %s62 = sphi 0, %s64
      %s65 = sphi 0, %s62
      %s66 = sphi 0, %s65
      %s82 = sphi 0, %s66
      %s88 = sphi 0, %s90
      %s91 = sphi 0, %s88
      %s92 = sphi 0, %s91
      %s108 = sphi 0, %s92
    $region4: #{tpu_custom_call.1} parent=1 // loop_header_branch
      %15 = sbr.rel (%p13) target = $region8
    $region5: #{tpu_custom_call.1} parent=1 // loop_body
      %s17 = ssub.s32 %s12, 1
      %s18 = ssub.s32 %s12, 2
      %s25 = sadd.s32 1, %s20
      %p26 = scmp.ge.s32.totalorder %s25, 1
      %s27 = scalar_select %p26, 0, %s25
      %s28 = sadd.s32 1, %s19
      %s29 = scalar_select %p26, %s28, %s19
      %p30 = scmp.ge.s32.totalorder %s29, 2
      %s31 = scalar_select %p30, 0, %s29
      %s32 = sadd.s32 %s19, %s20
      %s33 = sadd.s32 %s31, %s27
      %s34 = ssub.s32 %s32, %s33
      %p35 = scmp.eq.s32.totalorder %s34, 0
      %s37 = sadd.s32 %s36, 1
      %s38 = scalar_select %p35, %s36, %s37
      %p41 = pneg %p35
      %p42 = scmp.eq.s32.totalorder %s12, 1
      %p43 = por %p41, %p42
      %p44 = scmp.ne.s32.totalorder %s36, %s39
      %p45 = scmp.eq.s32.totalorder %s12, 0
      %p46 = por %p44, %p45
      %p47 = scmp.ne.s32.totalorder %s36, %s39
      %p48 = scmp.eq.s32.totalorder %s17, 1
      %p49 = por %p47, %p48
      %p50 = scmp.ne.s32.totalorder %s39, %s40
      %p51 = scmp.eq.s32.totalorder %s17, 0
      %p52 = por %p50, %p51
      %p53 = scmp.ne.s32.totalorder %s39, %s40
      %p54 = scmp.eq.s32.totalorder %s18, 1
      %p55 = por %p53, %p54
      %p57 = scmp.ne.s32.totalorder %s40, %s56
      %p58 = scmp.eq.s32.totalorder %s18, 0
      %p59 = por %p57, %p58
      %s60 = ssub.s32 %s19, %s31
      %p61 = scmp.eq.s32.totalorder %s60, 0
      %s63 = sadd.s32 %s62, 1
      %s64 = scalar_select %p61, %s62, %s63
      %p67 = pneg %p61
      %p68 = scmp.eq.s32.totalorder %s12, 1
      %p69 = por %p67, %p68
      %p70 = scmp.ne.s32.totalorder %s62, %s65
      %p71 = scmp.eq.s32.totalorder %s12, 0
      %p72 = por %p70, %p71
      %p73 = scmp.ne.s32.totalorder %s62, %s65
      %p74 = scmp.eq.s32.totalorder %s17, 1
      %p75 = por %p73, %p74
      %p76 = scmp.ne.s32.totalorder %s65, %s66
      %p77 = scmp.eq.s32.totalorder %s17, 0
      %p78 = por %p76, %p77
      %p79 = scmp.ne.s32.totalorder %s65, %s66
      %p80 = scmp.eq.s32.totalorder %s18, 1
      %p81 = por %p79, %p80
      %p83 = scmp.ne.s32.totalorder %s66, %s82
      %p84 = scmp.eq.s32.totalorder %s18, 0
      %p85 = por %p83, %p84
      %s86 = ssub.s32 %s19, %s31
      %p87 = scmp.eq.s32.totalorder %s86, 0
      %s89 = sadd.s32 %s88, 1
      %s90 = scalar_select %p87, %s88, %s89
      %p93 = pneg %p87
      %p94 = scmp.eq.s32.totalorder %s12, 1
      %p95 = por %p93, %p94
      %p96 = scmp.ne.s32.totalorder %s88, %s91
      %p97 = scmp.eq.s32.totalorder %s12, 0
      %p98 = por %p96, %p97
      %p99 = scmp.ne.s32.totalorder %s88, %s91
      %p100 = scmp.eq.s32.totalorder %s17, 1
      %p101 = por %p99, %p100
      %p102 = scmp.ne.s32.totalorder %s91, %s92
      %p103 = scmp.eq.s32.totalorder %s17, 0
      %p104 = por %p102, %p103
      %p105 = scmp.ne.s32.totalorder %s91, %s92
      %p106 = scmp.eq.s32.totalorder %s18, 1
      %p107 = por %p105, %p106
      %p109 = scmp.ne.s32.totalorder %s92, %s108
      %p110 = scmp.eq.s32.totalorder %s18, 0
      %p111 = por %p109, %p110
      %p112 = scmp.le.s32.totalorder 1, %s12
      %p113 = scmp.lt.s32.totalorder %s12, 3
      %p114 = pnand %p112, %p113
      %p115 = pneg %p114
      // Predicated region
      $region9: #{tpu_custom_call.1} parent=5 // pred_check
        _
      $region10: #{tpu_custom_call.1} parent=5 // pred_check_branch
        %117 = sbr.rel (%p114) target = $region12
      $region11: #{tpu_custom_call.1} parent=5 // pred_region
        %s118 = ssub.s32 %s12, 1
      $region12: #{tpu_custom_call.1} parent=5 // pred_fallthru
        _
      %p119 = scmp.lt.s32.totalorder %s12, 2
      // Predicated region
      $region13: #{tpu_custom_call.1} parent=5 // pred_check
        %p120 = pneg %p119
      $region14: #{tpu_custom_call.1} parent=5 // pred_check_branch
        %122 = sbr.rel (%p120) target = $region16
      $region15: #{tpu_custom_call.1} parent=5 // pred_region
        // Predicated region
        $region17: #{tpu_custom_call.1} parent=15 // pred_check
          %p123 = pneg %p46
        $region18: #{tpu_custom_call.1} parent=15 // pred_check_branch
          %125 = sbr.rel (%p123) target = $region20
        $region19: #{tpu_custom_call.1} parent=15 // pred_region
          %s126 = sand.u32 %s36, 1
          %s127 = scalar_lea.sflag [#allocation3], %s126
          %s128 = sand.u32 %s36, 1
          %s129 = smul.addr %s128, 8
          %s130 = scalar_lea.vmem [#allocation2], %s129
          %s131 = sadd.s32 %s19, %s20
          %s133 = ssub.s32 128, 128
          %134 = vsyncadd %s127, %s133
          %s135 = smul.addr %s131, 128
          %s136 = scalar_lea.hbm %s0, %s135
          %s138 = sshll.u32 %s130, 4
          %s139 = int_to_ptr.vmem [resolvable:$true] %s138
          %141 = dma.hbm_to_vmem [thread:$0]  %s136, 128, %s139, %s127
        $region20: #{tpu_custom_call.1} parent=15 // pred_fallthru
          _
      $region16: #{tpu_custom_call.1} parent=5 // pred_fallthru
        _
      %p142 = scmp.le.s32.totalorder 1, %s12
      %p143 = scmp.lt.s32.totalorder %s12, 3
      %p144 = pnand %p142, %p143
      %p145 = pneg %p144
      // Predicated region
      $region21: #{tpu_custom_call.1} parent=5 // pred_check
        _
      $region22: #{tpu_custom_call.1} parent=5 // pred_check_branch
        %147 = sbr.rel (%p144) target = $region24
      $region23: #{tpu_custom_call.1} parent=5 // pred_region
        %s148 = ssub.s32 %s12, 1
        %s149 = sand.u32 %s39, 1
        %s150 = scalar_lea.sflag [#allocation3], %s149
        %s151 = sand.u32 %s39, 1
        %s152 = smul.addr %s151, 8
        %s153 = scalar_lea.vmem [#allocation2], %s152
        // Predicated region
        $region25: #{tpu_custom_call.1} parent=23 // pred_check
          %p154 = pneg %p52
        $region26: #{tpu_custom_call.1} parent=23 // pred_check_branch
          %156 = sbr.rel (%p154) target = $region28
        $region27: #{tpu_custom_call.1} parent=23 // pred_region
          %157 = dma.done %s150, 128
        $region28: #{tpu_custom_call.1} parent=23 // pred_fallthru
          _
        %s158 = sand.u32 %s39, 1
        %s159 = scalar_lea.sflag [#allocation3], %s158
        %s160 = sand.u32 %s39, 1
        %s161 = smul.addr %s160, 8
        %s162 = scalar_lea.vmem [#allocation2], %s161
        %p163 = pneg %p52
        %p164 = pneg %p49
        %p165 = pneg %p78
        %p166 = pneg %p75
        %p167 = scmp.lt.s32.totalorder %s21, 1
        %s168 = scalar_select %p167, %s21, 1
        %s169 = scalar_lea.vmem %s1, %s168
        %p170 = pneg %p104
        %p171 = pneg %p101
        %p172 = scmp.lt.s32.totalorder %s21, 1
        %s173 = scalar_select %p172, %s21, 1
        %s174 = scalar_lea.vmem %s2, %s173
        %s175 = sadd.s32 %s21, %s22
        %p176 = scmp.lt.s32.totalorder %s21, 1
        %s177 = scalar_select %p176, %s21, 1
        %s178 = scalar_lea.vmem %s1, %s177
        %p179 = scmp.lt.s32.totalorder %s21, 1
        %s180 = scalar_select %p179, %s21, 1
        %s181 = scalar_lea.vmem %s2, %s180
        %p182 = scmp.eq.s32.totalorder %s22, 0
        // Predicated region
        $region29: #{tpu_custom_call.1} parent=23 // pred_check
          %p183 = pneg %p182
        $region30: #{tpu_custom_call.1} parent=23 // pred_check_branch
          %185 = sbr.rel (%p183) target = $region32
        $region31: #{tpu_custom_call.1} parent=23 // pred_region
          %vm186 = vcmask 0
          %187 = vst.msk [vmem:[%s178] sm:$0x1] %vm186, 0.0
          %188 = vst.msk [vmem:[%s181] sm:$0x1] %vm186, 0.0
        $region32: #{tpu_custom_call.1} parent=23 // pred_fallthru
          _
        %v189 = vld [vmem:[%s153] sm:$0xff]
        %v190 = vld [vmem:[%s178] sm:$0x1]
        %v191 = vand.u32 2147483647, %v189
        %vm192 = vcmask 523264
        %v193 = vsel %vm192, %v191, 0.0
        %194 = vadd.xlane.f32.xlu0 %v193
        %v195 = vpop.xlane.xlu0 %194
        %v196 = vrot.slane %v195, 4
        %v197 = vadd.f32 %v195, %v196
        %v198 = vrot.slane %v197, 2
        %v199 = vadd.f32 %v197, %v198
        %v200 = vrot.slane %v199, 1
        %v201 = vadd.f32 %v199, %v200
        %s202 = vtos %v201
        %v203 = vstv %s202
        %v204 = vadd.f32 %v190, %v203
        %vm205 = vcmask 0
        %206 = vst.msk [vmem:[%s178] sm:$0x1] %vm205, %v204
        %v207 = vmul.f32 %v189, %v189
        %v208 = vsel %vm192, %v207, 0.0
        %209 = vadd.xlane.f32.xlu0 %v208
        %v210 = vpop.xlane.xlu0 %209
        %v211 = vld [vmem:[%s181] sm:$0x1]
        %v212 = vrsqrt.pop %v210
        %v213 = vmul.f32 %v210, %v212
        %vm214 = vcmp.eq.f32.partialorder %v210, inf
        %v215 = vsel %vm214, %v210, %v213
        %vm216 = vcmp.eq.f32.partialorder %v210, 0.0
        %v217 = vand.u32 %v210, 2147483648
        %v218 = vsel %vm216, %v217, %v215
        %vm219 = vcmask 7168
        %v220 = vsel %vm219, %v218, 0.0
        %221 = vadd.xlane.f32.xlu0 %v220
        %v222 = vpop.xlane.xlu0 %221
        %v223 = vrot.slane %v222, 4
        %v224 = vadd.f32 %v222, %v223
        %v225 = vrot.slane %v224, 2
        %v226 = vadd.f32 %v224, %v225
        %v227 = vrot.slane %v226, 1
        %v228 = vadd.f32 %v226, %v227
        %s229 = vtos %v228
        %v230 = vstv %s229
        %v231 = vadd.f32 %v211, %v230
        %232 = vst.msk [vmem:[%s181] sm:$0x1] %vm205, %v231
        %p233 = scmp.lt.s32.totalorder %s21, 1
        %s234 = scalar_select %p233, %s21, 1
        %s235 = scalar_lea.vmem %s1, %s234
        %p236 = scmp.lt.s32.totalorder %s21, 1
        %s237 = scalar_select %p236, %s21, 1
        %s238 = scalar_lea.vmem %s2, %s237
        // Predicated region
        $region33: #{tpu_custom_call.1} parent=23 // pred_check
          %p239 = pneg %p75
        $region34: #{tpu_custom_call.1} parent=23 // pred_check_branch
          %241 = sbr.rel (%p239) target = $region36
        $region35: #{tpu_custom_call.1} parent=23 // pred_region
          _
        $region36: #{tpu_custom_call.1} parent=23 // pred_fallthru
          _
        // Predicated region
        $region37: #{tpu_custom_call.1} parent=23 // pred_check
          %p242 = pneg %p101
        $region38: #{tpu_custom_call.1} parent=23 // pred_check_branch
          %244 = sbr.rel (%p242) target = $region40
        $region39: #{tpu_custom_call.1} parent=23 // pred_region
          _
        $region40: #{tpu_custom_call.1} parent=23 // pred_fallthru
          _
      $region24: #{tpu_custom_call.1} parent=5 // pred_fallthru
        _
      %p245 = scmp.le.s32.totalorder 2, %s12
      // Predicated region
      $region41: #{tpu_custom_call.1} parent=5 // pred_check
        %p246 = pneg %p245
      $region42: #{tpu_custom_call.1} parent=5 // pred_check_branch
        %248 = sbr.rel (%p246) target = $region44
      $region43: #{tpu_custom_call.1} parent=5 // pred_region
        %s249 = ssub.s32 %s12, 2
        // Predicated region
        $region45: #{tpu_custom_call.1} parent=43 // pred_check
          %p250 = pneg %p81
        $region46: #{tpu_custom_call.1} parent=43 // pred_check_branch
          %252 = sbr.rel (%p250) target = $region48
        $region47: #{tpu_custom_call.1} parent=43 // pred_region
          %p253 = scmp.lt.s32.totalorder %s23, 1
          %s254 = scalar_select %p253, %s23, 1
          %s255 = scalar_lea.vmem %s1, %s254
        $region48: #{tpu_custom_call.1} parent=43 // pred_fallthru
          _
        // Predicated region
        $region49: #{tpu_custom_call.1} parent=43 // pred_check
          %p256 = pneg %p107
        $region50: #{tpu_custom_call.1} parent=43 // pred_check_branch
          %258 = sbr.rel (%p256) target = $region52
        $region51: #{tpu_custom_call.1} parent=43 // pred_region
          %p259 = scmp.lt.s32.totalorder %s23, 1
          %s260 = scalar_select %p259, %s23, 1
          %s261 = scalar_lea.vmem %s2, %s260
        $region52: #{tpu_custom_call.1} parent=43 // pred_fallthru
          _
      $region44: #{tpu_custom_call.1} parent=5 // pred_fallthru
        _
    $region6: #{tpu_custom_call.1} parent=1 // loop_footer
      %s16 = sadd.s32 1, %s12
    $region7: #{tpu_custom_call.1} parent=1 // loop_footer_branch
      %11 = sbr.rel target = $region3
    $region8: #{tpu_custom_call.1} parent=1 // loop_exit
      _
    %262 = vsyncpa [#allocation3], 1
    %s263 = scalar_lea.sflag [#allocation3], 1
    %264 = vsyncpa %s263, 1

</llo_original>
